<compile_context>
chip_gen: v5e
topology: v5e:2x2
jax: 0.10.0
libtpu: 0.0.40
codegen_flags: <defaults>
</compile_context>

<pallas_src>
import functools

import jax
import jax.numpy as jnp
from jax import lax
from jax.experimental import pallas as pl
from jax.experimental.pallas import tpu as pltpu


# ------------------------- generation-aware VMEM budget ----------------------

_VMEM_LIMIT = None


def _vmem_limit_bytes():
    """~3/4 of physical VMEM: ~48 MiB on v7x (64 MiB), ~96 MiB on v5e/v6e (128 MiB)."""
    global _VMEM_LIMIT
    if _VMEM_LIMIT is None:
        limit = 32 * 1024 * 1024  # safe fallback on every generation
        try:
            cap = getattr(pltpu.get_tpu_info(), "vmem_capacity_bytes", None)
            if cap:
                limit = max(limit, int(cap) * 3 // 4)
        except Exception:
            pass
        _VMEM_LIMIT = limit
    return _VMEM_LIMIT


# ------------------------------ small helpers ------------------------------


def _round_up(x, m):
    return (x + m - 1) // m * m


def _pad_to(x, shape):
    pads = [(0, t - s) for s, t in zip(x.shape, shape)]
    if all(p == (0, 0) for p in pads):
        return x
    return jnp.pad(x, pads)


def _gelu_tanh(x):
    # torch.nn.functional.gelu(x, approximate="tanh"), computed in f32
    c = jnp.float32(0.7978845608028654)  # sqrt(2/pi)
    return 0.5 * x * (1.0 + jnp.tanh(c * (x + 0.044715 * x * x * x)))


# ----------------------------- tiled linear (MXU) ---------------------------


def _linear_kernel(*refs, act, has_bias):
    if has_bias:
        x_ref, w_ref, b_ref, o_ref, acc_ref = refs
    else:
        x_ref, w_ref, o_ref, acc_ref = refs
        b_ref = None

    @pl.when(pl.program_id(2) == 0)
    def _init():
        acc_ref[...] = jnp.zeros_like(acc_ref)

    acc_ref[...] += jnp.dot(x_ref[...], w_ref[...],
                            preferred_element_type=jnp.float32)

    @pl.when(pl.program_id(2) == pl.num_programs(2) - 1)
    def _finish():
        out = acc_ref[...]
        if has_bias:
            out = out + b_ref[...]
        if act == "gelu_tanh":
            out = _gelu_tanh(out)
        o_ref[...] = out.astype(o_ref.dtype)


def linear(x, w, b=None, act=None, out_dtype=None, tm=512, tn=512, tk=512):
    """FastLinear: x @ W (+ b) with W stored (in, out). bf16 MXU, f32 accumulate.

    Default 512^3 tiles (~256 bf16-flop/byte per k-step, ~4 MiB double-buffered);
    clamp to 16-sublane / 128-lane rounded problem sizes for small shapes.
    """
    m, kdim = x.shape
    kdim2, n = w.shape
    assert kdim == kdim2
    out_dtype = x.dtype if out_dtype is None else out_dtype
    has_bias = b is not None

    tm = min(tm, _round_up(m, 16))       # bf16 packs 16 rows / vreg
    tn = min(tn, _round_up(n, 128))
    tk = min(tk, _round_up(kdim, 128))
    mp, np_, kp = _round_up(m, tm), _round_up(n, tn), _round_up(kdim, tk)

    xp = _pad_to(x.astype(jnp.bfloat16), (mp, kp))
    wp = _pad_to(w.astype(jnp.bfloat16), (kp, np_))

    in_specs = [
        pl.BlockSpec((tm, tk), lambda i, j, kk: (i, kk)),
        pl.BlockSpec((tk, tn), lambda i, j, kk: (kk, j)),
    ]
    operands = [xp, wp]
    if has_bias:
        bp = _pad_to(b.reshape(1, n).astype(jnp.float32), (1, np_))
        in_specs.append(pl.BlockSpec((1, tn), lambda i, j, kk: (0, j)))
        operands.append(bp)

    out = pl.pallas_call(
        functools.partial(_linear_kernel, act=act, has_bias=has_bias),
        out_shape=jax.ShapeDtypeStruct((mp, np_), out_dtype),
        grid=(mp // tm, np_ // tn, kp // tk),
        in_specs=in_specs,
        out_specs=pl.BlockSpec((tm, tn), lambda i, j, kk: (i, j)),
        scratch_shapes=[pltpu.VMEM((tm, tn), jnp.float32)],
        compiler_params=pltpu.CompilerParams(
            dimension_semantics=("parallel", "parallel", "arbitrary"),
            vmem_limit_bytes=_vmem_limit_bytes(),
        ),
    )(*operands)
    if (mp, np_) != (m, n):
        out = out[:m, :n]
    return out


# ---------------------- row-tiled LayerNorm (+ residual) --------------------


def _ln_kernel(*refs, eps, has_residual):
    if has_residual:
        x_ref, r_ref, g_ref, b_ref, y_ref, rout_ref = refs
        x = x_ref[...].astype(jnp.float32) + r_ref[...].astype(jnp.float32)
        rout_ref[...] = x.astype(rout_ref.dtype)
    else:
        x_ref, g_ref, b_ref, y_ref = refs
        x = x_ref[...].astype(jnp.float32)
    mu = jnp.mean(x, axis=-1, keepdims=True)
    xc = x - mu
    var = jnp.mean(xc * xc, axis=-1, keepdims=True)
    y = xc * lax.rsqrt(var + eps)
    y = y * g_ref[...] + b_ref[...]
    y_ref[...] = y.astype(y_ref.dtype)


def layer_norm(x, residual, gamma, beta, eps, tm=256):
    """FastLayerNorm(hidden, residual) -> (normed, new_residual).

    residual=None uses a dedicated kernel variant (no zero tensor is built) and
    the returned residual is simply the input array.
    """
    # TODO(synk): fuse ln_1 into the QKV matmul / ln_2 into c_fc (one tk=hidden
    # tile) to drop one hidden-states HBM round-trip per fusion per layer.
    t, h = x.shape
    tm = min(tm, _round_up(t, 16))
    tp = _round_up(t, tm)
    xp = _pad_to(x, (tp, h))
    g = gamma.reshape(1, h).astype(jnp.float32)
    b = beta.reshape(1, h).astype(jnp.float32)
    row = pl.BlockSpec((tm, h), lambda i: (i, 0))
    vec = pl.BlockSpec((1, h), lambda i: (0, 0))
    cp = pltpu.CompilerParams(
        dimension_semantics=("parallel",),
        vmem_limit_bytes=_vmem_limit_bytes(),   # v5e default 16 MiB would bind at h=6144
    )

    if residual is None:
        y = pl.pallas_call(
            functools.partial(_ln_kernel, eps=eps, has_residual=False),
            out_shape=jax.ShapeDtypeStruct((tp, h), x.dtype),
            grid=(tp // tm,),
            in_specs=[row, vec, vec],
            out_specs=row,
            compiler_params=cp,
        )(xp, g, b)
        return y[:t], x  # new residual is the (unmodified) input itself

    rp = _pad_to(residual, (tp, h))
    y, rout = pl.pallas_call(
        functools.partial(_ln_kernel, eps=eps, has_residual=True),
        out_shape=(jax.ShapeDtypeStruct((tp, h), x.dtype),
                   jax.ShapeDtypeStruct((tp, h), x.dtype)),
        grid=(tp // tm,),
        in_specs=[row, row, vec, vec],
        out_specs=(row, row),
        compiler_params=cp,
    )(xp, rp, g, b)
    return y[:t], rout[:t]


# ----------------------- flash-style MQA attention --------------------------


def _flash_mqa_kernel(segq_ref, segk_ref, q_ref, k_ref, v_ref, o_ref,
                      qs_ref, m_ref, l_ref, acc_ref, *,
                      scale, tile, hsub, head_dim):
    qi = pl.program_id(1)
    ki = pl.program_id(2)

    @pl.when(ki == 0)
    def _init():
        # Hoist softmax-scale fold + bf16 repack out of the kv loop.
        qs_ref[...] = (q_ref[...].astype(jnp.float32) * scale).astype(qs_ref.dtype)
        m_ref[...] = jnp.full_like(m_ref, -1e30)
        l_ref[...] = jnp.zeros_like(l_ref)
        acc_ref[...] = jnp.zeros_like(acc_ref)

    # Causal block skip: kv blocks strictly above the diagonal are fully masked
    # (tile_q == tile_k), so skip their dot/exp/accumulate entirely.
    @pl.when(ki <= qi)
    def _body():
        koff = pl.multiple_of(ki * tile, tile)
        k_t = k_ref[pl.ds(koff, tile), :]     # VMEM-resident K, no per-step DMA
        v_t = v_ref[pl.ds(koff, tile), :]     # VMEM-resident V

        # Causal + varlen (segment) mask; shared by all heads in this block.
        q_pos = qi * tile + lax.broadcasted_iota(jnp.int32, (tile, tile), 0)
        k_pos = koff + lax.broadcasted_iota(jnp.int32, (tile, tile), 1)
        allowed = (segq_ref[...] == segk_ref[...]) & (k_pos <= q_pos)

        for hi in range(hsub):                 # static unroll over heads
            qh = qs_ref[:, hi * head_dim:(hi + 1) * head_dim]     # (tile, d)
            # Contract head dim directly — no materialized K^T.
            s = lax.dot_general(qh, k_t, (((1,), (1,)), ((), ())),
                                preferred_element_type=jnp.float32)  # (tile, tile)
            s = jnp.where(allowed, s, -1e30)
            m_prev = m_ref[hi]
            m_cur = jnp.maximum(m_prev, jnp.max(s, axis=-1, keepdims=True))
            alpha = jnp.exp(m_prev - m_cur)
            # Second where is required: guards blocks whose rows are fully masked
            # (s - m_cur == 0 there would otherwise contribute exp(0) == 1).
            p = jnp.where(allowed, jnp.exp(s - m_cur), 0.0)
            l_ref[hi] = alpha * l_ref[hi] + jnp.sum(p, axis=-1, keepdims=True)
            acc_ref[hi] = alpha * acc_ref[hi] + jnp.dot(
                p.astype(v_t.dtype), v_t, preferred_element_type=jnp.float32)
            m_ref[hi] = m_cur

    @pl.when(ki == pl.num_programs(2) - 1)
    def _finish():
        for hi in range(hsub):
            l = l_ref[hi]
            l = jnp.where(l <= 0.0, 1.0, l)    # fully-masked padding rows
            o_ref[:, hi * head_dim:(hi + 1) * head_dim] = (
                acc_ref[hi] * pl.reciprocal(l, approx=True)).astype(o_ref.dtype)


def mqa_attention(q2d, k, v, seg, scale, num_heads, head_size, tile=256):
    """Multi-query causal varlen attention (single shared K/V head).

    q2d is the (T, num_heads*head_size) slab straight from the QKV projection
    (no per-layer transpose); output is written back in the same layout.
    """
    t = q2d.shape[0]
    d = head_size
    tile = min(tile, _round_up(t, 16))
    tp = _round_up(t, tile)

    # Heads per grid step: amortize per-step overhead, keep lane blocks 128-aligned.
    if num_heads % 8 == 0 and (8 * d) % 128 == 0:
        hsub = 8
    else:
        hsub = num_heads

    qp = _pad_to(q2d.astype(jnp.bfloat16), (tp, num_heads * d))
    kp = _pad_to(k.astype(jnp.bfloat16), (tp, d))
    vp = _pad_to(v.astype(jnp.bfloat16), (tp, d))
    segp = jnp.pad(seg.astype(jnp.int32), (0, tp - t), constant_values=-1)
    seg_q = segp.reshape(tp, 1)
    seg_k = segp.reshape(1, tp)

    # TODO(synk): for very long prefill (Tp*d*2B*2 > VMEM budget) fall back to a
    # chunked-resident K/V panel instead of full residency.
    o = pl.pallas_call(
        functools.partial(_flash_mqa_kernel, scale=scale, tile=tile,
                          hsub=hsub, head_dim=d),
        out_shape=jax.ShapeDtypeStruct((tp, num_heads * d), jnp.bfloat16),
        grid=(num_heads // hsub, tp // tile, tp // tile),
        in_specs=[
            pl.BlockSpec((tile, 1), lambda h, qi, ki: (qi, 0)),        # seg_q
            pl.BlockSpec((1, tile), lambda h, qi, ki: (0, ki)),        # seg_k
            pl.BlockSpec((tile, hsub * d), lambda h, qi, ki: (qi, h)),  # q
            pl.BlockSpec((tp, d), lambda h, qi, ki: (0, 0)),           # K resident
            pl.BlockSpec((tp, d), lambda h, qi, ki: (0, 0)),           # V resident
        ],
        out_specs=pl.BlockSpec((tile, hsub * d), lambda h, qi, ki: (qi, h)),
        scratch_shapes=[
            pltpu.VMEM((tile, hsub * d), jnp.bfloat16),   # scaled q (hoisted)
            pltpu.VMEM((hsub, tile, 1), jnp.float32),     # running max
            pltpu.VMEM((hsub, tile, 1), jnp.float32),     # running denom
            pltpu.VMEM((hsub, tile, d), jnp.float32),     # output accumulator
        ],
        compiler_params=pltpu.CompilerParams(
            dimension_semantics=("parallel", "parallel", "arbitrary"),
            vmem_limit_bytes=_vmem_limit_bytes(),
        ),
    )(seg_q, seg_k, qp, kp, vp)
    return o[:t]


# ------------------------------ model (glue) --------------------------------


def flash_mq_attention(p, hidden_states, seg, num_heads, head_size):
    t = hidden_states.shape[0]
    qkv = linear(hidden_states, p["c_attn_w"], p["c_attn_b"])
    q = qkv[:, : num_heads * head_size]            # stays (T, H*D); no transpose
    kv = qkv[:, num_heads * head_size:]
    k = kv[:, :head_size]
    v = kv[:, head_size:]
    scale = head_size ** (-0.5)
    attn = mqa_attention(q, k, v, seg, scale, num_heads, head_size)
    out = linear(attn, p["c_proj_w"], p["c_proj_b"])
    layer_past = kv.reshape(t, 2, 1, head_size)    # cache writeback (prefill path)
    return out, layer_past


def block_forward(p, hidden_states, residual, seg, num_heads, head_size, eps):
    # Residual adds are fused into the LayerNorm kernels (FastLayerNorm semantics).
    h, residual = layer_norm(hidden_states, residual, p["ln1_g"], p["ln1_b"], eps)
    attn_out, layer_past = flash_mq_attention(p, h, seg, num_heads, head_size)
    h, residual = layer_norm(attn_out, residual, p["ln2_g"], p["ln2_b"], eps)
    h = linear(h, p["c_fc_w"], p["c_fc_b"], act="gelu_tanh")
    mlp_out = linear(h, p["mlp_proj_w"], p["mlp_proj_b"])
    return mlp_out, residual, layer_past


def flash_santacoder_forward(params, cfg, input_ids, position_ids, cu_seqlens,
                             cu_seqlens_q, max_s, lm_head_indices=None):
    del cu_seqlens_q, max_s  # only used by the decode (past_key_values) path
    num_heads = cfg["num_attention_heads"]
    head_size = cfg["hidden_size"] // num_heads
    eps = cfg["layer_norm_epsilon"]

    hidden_states = (params["wte"][input_ids]
                     + params["wpe"][position_ids]).astype(jnp.bfloat16)
    total_tokens = hidden_states.shape[0]
    pos = jnp.arange(total_tokens, dtype=jnp.int32)
    # Per-token segment id (which packed sequence a token belongs to).
    seg = jnp.searchsorted(cu_seqlens[1:], pos, side="right").astype(jnp.int32)

    residual = None
    past = []
    for layer_params in params["layers"]:
        hidden_states, residual, layer_past = block_forward(
            layer_params, hidden_states, residual, seg, num_heads, head_size, eps)
        past.append(layer_past)
    hidden_states, _ = layer_norm(hidden_states, residual,
                                  params["lnf_g"], params["lnf_b"], eps)
    if lm_head_indices is not None:
        hidden_states = hidden_states[lm_head_indices]
    logits = linear(hidden_states, params["lm_head_w"], None,
                    out_dtype=jnp.float32, tn=1024)
    past_key_values = jnp.stack(past, axis=0)  # (n_layers, T, 2, 1, head_size)
    return logits, past_key_values


# --------------------------- deterministic params ---------------------------


def init_params(cfg, key):
    hs = cfg["hidden_size"]
    nh = cfg["num_attention_heads"]
    head = hs // nh
    inner = cfg["n_inner"] if cfg["n_inner"] is not None else 4 * hs
    vocab = cfg["vocab_size"]
    maxp = cfg["max_position_embeddings"]

    def nrm_bf16(k, shape):
        return (0.02 * jax.random.normal(k, shape, dtype=jnp.float32)).astype(jnp.bfloat16)

    def nrm_f32(k, shape):
        return 0.02 * jax.random.normal(k, shape, dtype=jnp.float32)

    k_wte, k_wpe, k_head, k_layers = jax.random.split(key, 4)
    params = {
        "wte": nrm_bf16(k_wte, (vocab, hs)),
        "wpe": nrm_bf16(k_wpe, (maxp, hs)),
        "lnf_g": jnp.ones((hs,), jnp.float32),
        "lnf_b": jnp.zeros((hs,), jnp.float32),
        # Weights stored transposed vs PyTorch nn.Linear: (in, out).
        "lm_head_w": nrm_bf16(k_head, (hs, vocab)),
        "layers": [],
    }
    for li in range(cfg["num_hidden_layers"]):
        ks = jax.random.split(jax.random.fold_in(k_layers, li), 8)
        params["layers"].append({
            "ln1_g": jnp.ones((hs,), jnp.float32),
            "ln1_b": jnp.zeros((hs,), jnp.float32),
            "ln2_g": jnp.ones((hs,), jnp.float32),
            "ln2_b": jnp.zeros((hs,), jnp.float32),
            "c_attn_w": nrm_bf16(ks[0], (hs, hs + 2 * head)),
            "c_attn_b": nrm_f32(ks[1], (hs + 2 * head,)),
            "c_proj_w": nrm_bf16(ks[2], (hs, hs)),
            "c_proj_b": nrm_f32(ks[3], (hs,)),
            "c_fc_w": nrm_bf16(ks[4], (hs, inner)),
            "c_fc_b": nrm_f32(ks[5], (inner,)),
            "mlp_proj_w": nrm_bf16(ks[6], (inner, hs)),
            "mlp_proj_b": nrm_f32(ks[7], (hs,)),
        })
    return params


# ----------------------------------- main ------------------------------------

if __name__ == "__main__":
    cfg = dict(
        vocab_size=256,
        max_position_embeddings=64,
        hidden_size=32,
        num_attention_heads=4,
        num_hidden_layers=2,
        n_inner=None,                       # -> 4 * hidden = 128
        activation_function="gelu_pytorch_tanh",
        layer_norm_epsilon=1e-5,
    )

    key = jax.random.PRNGKey(0)
    pkey, ikey = jax.random.split(key)
    params = init_params(cfg, pkey)

    # Two packed sequences of lengths 5 and 3 (total 8 tokens), prefill path.
    total_tokens = 8
    cu_seqlens = jnp.array([0, 5, 8], dtype=jnp.int32)
    cu_seqlens_q = None
    max_s = 5
    input_ids = jax.random.randint(ikey, (total_tokens,), 0, cfg["vocab_size"],
                                   dtype=jnp.int32)
    position_ids = jnp.array([0, 1, 2, 3, 4, 0, 1, 2], dtype=jnp.int32)

    logits, present = flash_santacoder_forward(
        params, cfg, input_ids, position_ids, cu_seqlens, cu_seqlens_q, max_s,
        lm_head_indices=None,
    )
    jax.block_until_ready(logits)
    jax.block_until_ready(present)

    head_size = cfg["hidden_size"] // cfg["num_attention_heads"]
    assert logits.shape == (total_tokens, cfg["vocab_size"])
    assert present.shape == (cfg["num_hidden_layers"], total_tokens, 2, 1, head_size)
    assert bool(jnp.isfinite(logits).all())
    # TODO(synk): decode path (past_key_values scatter via layer_past_present_indices)
    # and tensor-parallel all-reduce/all-gather branches are not exercised here.
    print("KERNEL_OK")
</pallas_src>

<mosaic_0001>
module attributes {stable_mosaic.version = 11 : i64} {
  func.func @_ln_kernel(%arg0: i32, %arg1: memref<16x32xbf16, #tpu.memory_space<vmem>>, %arg2: memref<1x32xf32, #tpu.memory_space<vmem>>, %arg3: memref<1x32xf32, #tpu.memory_space<vmem>>, %arg4: memref<16x32xbf16, #tpu.memory_space<vmem>>) attributes {dimension_semantics = [#tpu.dimension_semantics<parallel>], iteration_bounds = array<i64: 1>, scalar_prefetch = 0 : i64, scratch_operands = 0 : i64, tpu.core_type = #tpu.core_type<tc>, window_params = [{transform_indices = @transform_0, window_bounds = array<i64: 16, 32>}, {pipeline_mode = #tpu.pipeline_mode<synchronous>, transform_indices = @transform_1, window_bounds = array<i64: 1, 32>}, {pipeline_mode = #tpu.pipeline_mode<synchronous>, transform_indices = @transform_2, window_bounds = array<i64: 1, 32>}, {transform_indices = @transform_3, window_bounds = array<i64: 16, 32>}]} {
    %c0 = arith.constant 0 : index
    %c0_0 = arith.constant 0 : index
    %0 = vector.load %arg1[%c0, %c0_0] : memref<16x32xbf16, #tpu.memory_space<vmem>>, vector<16x32xbf16>
    %1 = arith.extf %0 : vector<16x32xbf16> to vector<16x32xf32>
    %cst = arith.constant dense<0.000000e+00> : vector<16xf32>
    %2 = vector.multi_reduction <add>, %1, %cst [1] : vector<16x32xf32> to vector<16xf32>
    %3 = vector.shape_cast %2 : vector<16xf32> to vector<16x1xf32>
    %cst_1 = arith.constant 3.200000e+01 : f32
    %4 = vector.broadcast %cst_1 : f32 to vector<16x1xf32>
    %5 = arith.divf %3, %4 : vector<16x1xf32>
    %6 = vector.broadcast %5 : vector<16x1xf32> to vector<16x32xf32>
    %7 = arith.subf %1, %6 : vector<16x32xf32>
    %8 = arith.mulf %7, %7 : vector<16x32xf32>
    %cst_2 = arith.constant dense<0.000000e+00> : vector<16xf32>
    %9 = vector.multi_reduction <add>, %8, %cst_2 [1] : vector<16x32xf32> to vector<16xf32>
    %10 = vector.shape_cast %9 : vector<16xf32> to vector<16x1xf32>
    %cst_3 = arith.constant 3.200000e+01 : f32
    %11 = vector.broadcast %cst_3 : f32 to vector<16x1xf32>
    %12 = arith.divf %10, %11 : vector<16x1xf32>
    %cst_4 = arith.constant 9.99999974E-6 : f32
    %13 = vector.broadcast %cst_4 : f32 to vector<16x1xf32>
    %14 = arith.addf %12, %13 : vector<16x1xf32>
    %15 = math.rsqrt %14 : vector<16x1xf32>
    %16 = vector.broadcast %15 : vector<16x1xf32> to vector<16x32xf32>
    %17 = arith.mulf %7, %16 : vector<16x32xf32>
    %c0_5 = arith.constant 0 : index
    %c0_6 = arith.constant 0 : index
    %18 = vector.load %arg2[%c0_5, %c0_6] : memref<1x32xf32, #tpu.memory_space<vmem>>, vector<1x32xf32>
    %19 = vector.broadcast %18 : vector<1x32xf32> to vector<16x32xf32>
    %20 = arith.mulf %17, %19 : vector<16x32xf32>
    %c0_7 = arith.constant 0 : index
    %c0_8 = arith.constant 0 : index
    %21 = vector.load %arg3[%c0_7, %c0_8] : memref<1x32xf32, #tpu.memory_space<vmem>>, vector<1x32xf32>
    %22 = vector.broadcast %21 : vector<1x32xf32> to vector<16x32xf32>
    %23 = arith.addf %20, %22 : vector<16x32xf32>
    %24 = arith.truncf %23 : vector<16x32xf32> to vector<16x32xbf16>
    %c0_9 = arith.constant 0 : index
    %c0_10 = arith.constant 0 : index
    %25 = vector.load %arg4[%c0_9, %c0_10] : memref<16x32xbf16, #tpu.memory_space<vmem>>, vector<16x32xbf16>
    tpu.vector_store %arg4[%c0_9, %c0_10], %24 {strides = array<i32>} : memref<16x32xbf16, #tpu.memory_space<vmem>>, vector<16x32xbf16>,
    return
  }
  func.func @transform_0(%arg0: i32) -> (i32, i32) {
    %c0_i32 = arith.constant 0 : i32
    %c0_i32_0 = arith.constant 0 : i32
    return %arg0, %c0_i32 : i32, i32
  }
  func.func @transform_1(%arg0: i32) -> (i32, i32) {
    %c0_i32 = arith.constant 0 : i32
    %c0_i32_0 = arith.constant 0 : i32
    %c0_i32_1 = arith.constant 0 : i32
    return %c0_i32, %c0_i32_0 : i32, i32
  }
  func.func @transform_2(%arg0: i32) -> (i32, i32) {
    %c0_i32 = arith.constant 0 : i32
    %c0_i32_0 = arith.constant 0 : i32
    %c0_i32_1 = arith.constant 0 : i32
    return %c0_i32, %c0_i32_0 : i32, i32
  }
  func.func @transform_3(%arg0: i32) -> (i32, i32) {
    %c0_i32 = arith.constant 0 : i32
    %c0_i32_0 = arith.constant 0 : i32
    return %arg0, %c0_i32 : i32, i32
  }
}

</mosaic_0001>

<llo_original>
// kernel: tpu_custom_call.1
$region0: #{tpu_custom_call.1}
  #allocation0 [shape = 'u32[]', space=smem, size = 0x4, offset = 0x4, fixed_abs, tag = 'smem constant byte address 0x4 - core index']
  #allocation1 [shape = 'u32[72,128]{1,0:T(1,128)}', space=vmem, size = 0x9000, scoped, tag = 'internal scratch']
  %s0 = inlined_call_operand.hbm [shape: bf16[16,32], index: 0, kind: input, shape index: {}]
  %s1 = inlined_call_operand.hbm [shape: f32[1,32], index: 1, kind: input, shape index: {}]
  %s2 = inlined_call_operand.vmem [shape: f32[1,32], index: 2, kind: input, shape index: {}]
  %s3 = inlined_call_operand.hbm [shape: bf16[16,32], index: 3, kind: output, shape index: {}]
  %s4 = sld [smem:[#allocation0]]
  $region30: #{tpu_custom_call.1} parent=0
    _
  %s6 = ssub.s32 1, %s4
  %s7 = scalar_select 0, %s6, %s4
  $region1: #{tpu_custom_call.1} parent=0
    #allocation2 [shape = 'u8[4096]{0}', space=vmem, size = 0x1000, scoped, tag = 'input window, operand 0, single buffered']
    #allocation3 [shape = 's32[1]{0}', space=sflag, size = 0x4, scoped, tag = 'scoped memory for tpu_custom_call.1']
    #allocation4 [shape = 's32[1]{0}', space=sflag, size = 0x4, scoped, tag = 'scoped memory for tpu_custom_call.1']
    #allocation5 [shape = 'u8[512]{0}', space=vmem, size = 0x400, scoped, tag = 'input window, operand 1, single buffered']
    #allocation6 [shape = 's32[1]{0}', space=sflag, size = 0x4, scoped, tag = 'scoped memory for tpu_custom_call.1']
    #allocation7 [shape = 'u8[4096]{0}', space=vmem, size = 0x1000, scoped, tag = 'output window, operand 0, single buffered']
    %8 = vsyncpa [#allocation3], 0
    %9 = vsyncpa [#allocation6], 0
    %10 = vsyncpa [#allocation4], 0
    // Predicated region
    $region2: #{tpu_custom_call.1} parent=1 // pred_check
      _
    $region3: #{tpu_custom_call.1} parent=1 // pred_check_branch
      %12 = sbr.rel (0) target = $region5
    $region4: #{tpu_custom_call.1} parent=1 // pred_region
      %14 = vsyncadd [#allocation3], 0
      %s15 = sshll.u32 %s0, 4
      %s16 = int_to_ptr.hbm [resolvable:$true] %s15
      %s17 = sshll.u32 [#allocation2], 4
      %s18 = int_to_ptr.vmem [resolvable:$true] %s17
      %23 = dma.hbm_to_vmem [thread:$0]  %s16, 128, %s18, [#allocation3], 64, 64, 4
    $region5: #{tpu_custom_call.1} parent=1 // pred_fallthru
      _
    // Predicated region
    $region6: #{tpu_custom_call.1} parent=1 // pred_check
      _
    $region7: #{tpu_custom_call.1} parent=1 // pred_check_branch
      %25 = sbr.rel (0) target = $region9
    $region8: #{tpu_custom_call.1} parent=1 // pred_region
      %27 = vsyncadd [#allocation6], 0
      %s29 = sshll.u32 %s1, 4
      %s30 = int_to_ptr.hbm [resolvable:$true] %s29
      %s31 = sshll.u32 [#allocation5], 4
      %s32 = int_to_ptr.vmem [resolvable:$true] %s31
      %34 = dma.hbm_to_vmem [thread:$0]  %s30, 16, %s32, [#allocation6]
    $region9: #{tpu_custom_call.1} parent=1 // pred_fallthru
      _
    // Predicated region
    $region10: #{tpu_custom_call.1} parent=1 // pred_check
      _
    $region11: #{tpu_custom_call.1} parent=1 // pred_check_branch
      %36 = sbr.rel (0) target = $region13
    $region12: #{tpu_custom_call.1} parent=1 // pred_region
      _
    $region13: #{tpu_custom_call.1} parent=1 // pred_fallthru
      _
    // Predicated region
    $region14: #{tpu_custom_call.1} parent=1 // pred_check
      _
    $region15: #{tpu_custom_call.1} parent=1 // pred_check_branch
      %38 = sbr.rel (0) target = $region17
    $region16: #{tpu_custom_call.1} parent=1 // pred_region
      %40 = dma.done [#allocation3], 128
    $region17: #{tpu_custom_call.1} parent=1 // pred_fallthru
      _
    // Predicated region
    $region18: #{tpu_custom_call.1} parent=1 // pred_check
      _
    $region19: #{tpu_custom_call.1} parent=1 // pred_check_branch
      %42 = sbr.rel (0) target = $region21
    $region20: #{tpu_custom_call.1} parent=1 // pred_region
      %44 = dma.done [#allocation6], 16
    $region21: #{tpu_custom_call.1} parent=1 // pred_fallthru
      _
    %v45 = vld [vmem:[#allocation2] sm:$0xf]
    %v46 = vld [vmem:[#allocation2 + $0x4] sm:$0xf]
    %v47 = vunpack.c.l.bf16 %v45
    %v48 = vunpack.c.l.bf16 %v46
    %vm49 = vcmask 261120
    %v50 = vsel %vm49, %v47, 0.0
    %51 = vadd.xlane.f32.xlu0 %v50
    %v52 = vpop.xlane.xlu0 %51
    %v53 = vsel %vm49, %v48, 0.0
    %54 = vadd.xlane.f32.xlu0 %v53
    %v55 = vpop.xlane.xlu0 %54
    %v56 = vrcp.pop 32.0
    %v57 = vmul.f32 32.0, %v56
    %v58 = vsub.f32 1.0, %v57
    %v59 = vmul.f32 %v56, %v58
    %v60 = vadd.f32 %v56, %v59
    %vm61 = vweird.f32 %v56
    %v62 = vsel %vm61, %v56, %v60
    %v63 = vmul.f32 %v52, %v62
    %v64 = vmul.f32 %v55, %v62
    %v65 = vsub.f32 %v47, %v63
    %v66 = vsub.f32 %v48, %v64
    %v67 = vmul.f32 %v65, %v65
    %v68 = vmul.f32 %v66, %v66
    %v69 = vsel %vm49, %v67, 0.0
    %70 = vadd.xlane.f32.xlu0 %v69
    %v71 = vpop.xlane.xlu0 %70
    %v72 = vsel %vm49, %v68, 0.0
    %73 = vadd.xlane.f32.xlu0 %v72
    %v74 = vpop.xlane.xlu0 %73
    %v75 = vmul.f32 %v71, %v62
    %v76 = vmul.f32 %v74, %v62
    %v77 = vadd.f32 %v75, 1e-05
    %v78 = vadd.f32 %v76, 1e-05
    %v79 = vrsqrt.pop %v77
    %v80 = vmul.f32 %v79, %v77
    %v81 = vmul.f32 %v80, %v79
    %v82 = vmul.f32 0.5, %v81
    %v83 = vsub.f32 1.5, %v82
    %v84 = vmul.f32 %v79, %v83
    %vm85 = vweird.f32 %v77
    %vm86 = vweird.f32 %v79
    %vm87 = vmor %vm85, %vm86
    %v88 = vsel %vm87, %v79, %v84
    %v89 = vrsqrt.pop %v78
    %v90 = vmul.f32 %v89, %v78
    %v91 = vmul.f32 %v90, %v89
    %v92 = vmul.f32 0.5, %v91
    %v93 = vsub.f32 1.5, %v92
    %v94 = vmul.f32 %v89, %v93
    %vm95 = vweird.f32 %v78
    %vm96 = vweird.f32 %v89
    %vm97 = vmor %vm95, %vm96
    %v98 = vsel %vm97, %v89, %v94
    %v99 = vmul.f32 %v65, %v88
    %v100 = vmul.f32 %v66, %v98
    %v101 = vld [vmem:[#allocation5] sm:$0x1]
    %v103 = vperm.slane %v101, 0
    %v105 = vmul.f32 %v99, %v103
    %v106 = vmul.f32 %v100, %v103
    %v107 = vld [vmem:[%s2] sm:$0x1]
    %v109 = vperm.slane %v107, 0
    %v111 = vadd.f32 %v105, %v109
    %v112 = vadd.f32 %v106, %v109
    %v113 = vpack.c.bf16 %v111, %v111
    %v114 = vpack.c.bf16 %v112, %v112
    %vm115 = vcmask 257024
    %116 = vst.msk [vmem:[#allocation7] sm:$0xf] %vm115, %v113
    %117 = vst.msk [vmem:[#allocation7 + $0x4] sm:$0xf] %vm115, %v114
    // Predicated region
    $region22: #{tpu_custom_call.1} parent=1 // pred_check
      _
    $region23: #{tpu_custom_call.1} parent=1 // pred_check_branch
      %119 = sbr.rel (0) target = $region25
    $region24: #{tpu_custom_call.1} parent=1 // pred_region
      %121 = vsyncadd [#allocation4], 0
      %s122 = sshll.u32 [#allocation7], 4
      %s123 = int_to_ptr.vmem [resolvable:$true] %s122
      %s124 = sshll.u32 %s3, 4
      %s125 = int_to_ptr.hbm [resolvable:$true] %s124
      %130 = dma.vmem_to_hbm [thread:$0]  %s123, 128, %s125, [#allocation4], 64, 64, 4
    $region25: #{tpu_custom_call.1} parent=1 // pred_fallthru
      _
    // Predicated region
    $region26: #{tpu_custom_call.1} parent=1 // pred_check
      _
    $region27: #{tpu_custom_call.1} parent=1 // pred_check_branch
      %132 = sbr.rel (0) target = $region29
    $region28: #{tpu_custom_call.1} parent=1 // pred_region
      %134 = dma.done [#allocation4], 128
    $region29: #{tpu_custom_call.1} parent=1 // pred_fallthru
      _
    %135 = vsyncpa [#allocation3], 1
    %136 = vsyncpa [#allocation6], 1
    %137 = vsyncpa [#allocation4], 1

</llo_original>
